<compile_context>
chip_gen: v5e
topology: v5e:2x2
jax: 0.10.0
libtpu: 0.0.40
codegen_flags: <defaults>
</compile_context>

<pallas_src>
import jax
import jax.numpy as jnp
from jax.experimental import pallas as pl
from jax.experimental.pallas import tpu as pltpu


# ----------------------------- Pallas kernel ------------------------------------------
def _diffusion_loss_kernel(img_ref, noise_ref, coef_ref, w_ref, bias_ref, out_ref):
    """Single invocation, whole batch.  N = B*HW is the lane axis.

      img_ref, noise_ref : (C, N)   raw image in [0,1] / Gaussian noise
      coef_ref           : (4, N)   rows = [2*sqrt_ac, sqrt_1m_ac, -sqrt_ac,
                                            loss_weight/(B*C*HW)] per sample, lane-expanded
      w_ref              : (C, C)   1x1-conv weight
      bias_ref           : (C, N)   conv bias + per-sample time embedding, pre-combined
      out_ref            : (1, 128) scalar loss broadcast across lanes
    """
    img = img_ref[...]
    noise = noise_ref[...]
    coef = coef_ref[...]

    c_img = coef[0:1, :]          # 2*sqrt(alphas_cumprod[t_b])   (x*2-1 folded in)
    c_noise = coef[1:2, :]        # sqrt(1 - alphas_cumprod[t_b])
    c_off = coef[2:3, :]          # -sqrt(alphas_cumprod[t_b])
    w_red = coef[3:4, :]          # loss_weight[t_b] / (B*C*HW)

    # normalize_to_neg_one_to_one + q_sample, fused elementwise on the VPU.
    x_t = c_img * img + c_noise * noise + c_off                      # (C, N)

    # Synthetic denoiser: 1x1 conv == channel mix.  At C=4 the MXU is wasted, so do it
    # as C unrolled outer-product multiply-adds on the VPU, starting from the combined
    # (conv bias + time-embedding) map.
    w = w_ref[...]                                                   # (C, C)
    h = bias_ref[...]                                                # (C, N)
    for c in range(img_ref.shape[0]):                                # static unroll, C small
        h = h + w[:, c:c + 1] * x_t[c:c + 1, :]

    # objective == 'pred_noise'  =>  target = noise.
    # loss = mean_b( mean_{c,hw}(diff^2) * loss_weight[t_b] ) collapses to one weighted
    # full reduction because w_red already carries loss_weight/(B*C*HW) per lane.
    diff = h - noise
    loss = jnp.sum(diff * diff * w_red)

    out_ref[...] = jnp.broadcast_to(loss, out_ref.shape).astype(out_ref.dtype)


# ----------------------------- schedule / model glue ----------------------------------
def make_schedule(timesteps=1000, beta_start=1e-4, beta_end=0.02):
    betas = jnp.linspace(beta_start, beta_end, timesteps, dtype=jnp.float32)
    alphas = 1.0 - betas
    alphas_cumprod = jnp.cumprod(alphas)
    sqrt_ac = jnp.sqrt(alphas_cumprod)
    sqrt_om = jnp.sqrt(1.0 - alphas_cumprod)
    # pred_noise + min_snr_loss_weight=False  =>  loss_weight = snr/snr == 1 identically;
    # use ones directly instead of a needless (NaN-prone) divide.
    loss_weight = jnp.ones_like(alphas_cumprod)
    return sqrt_ac, sqrt_om, loss_weight


def sinusoidal_embedding(t, dim):
    half = dim // 2
    freqs = jnp.exp(-jnp.log(10000.0) * jnp.arange(half, dtype=jnp.float32) / (half - 1))
    args = t.astype(jnp.float32)[:, None] * freqs[None, :]
    return jnp.concatenate([jnp.sin(args), jnp.cos(args)], axis=-1)   # (B, dim)


def diffusion_forward(img, key, params, schedule, *, image_size, num_timesteps):
    """Equivalent of Diffusion.forward(img): returns scalar training loss."""
    w, bias, temb_w, temb_b = params
    sqrt_ac, sqrt_om, loss_weight = schedule

    B, C, H, W = img.shape
    assert H == image_size and W == image_size
    HW = H * W
    N = B * HW

    k_t, k_noise = jax.random.split(key)
    t = jax.random.randint(k_t, (B,), 0, num_timesteps)                   # torch.randint
    # TODO(synk): at production sizes generate the noise in-kernel (pltpu.prng_seed +
    # pltpu.prng_random_bits / Box-Muller) to cut HBM read traffic roughly in half;
    # kept as an explicit input here so the pure-JAX reference check is exact.
    noise = jax.random.normal(k_noise, img.shape, dtype=jnp.float32)      # torch.randn_like

    # Tiny time-embedding MLP kept in JAX glue.
    temb = jnp.tanh(sinusoidal_embedding(t, temb_w.shape[0])) @ temb_w + temb_b   # (B, C)

    # ---- glue: fold normalization / loss weight / bias into lane-expanded rows --------
    sa = sqrt_ac[t]                        # extract(sqrt_alphas_cumprod, t, ...)
    so = sqrt_om[t]                        # extract(sqrt_one_minus_alphas_cumprod, t, ...)
    lw = loss_weight[t]
    per_sample = jnp.stack([2.0 * sa, so, -sa, lw / (B * C * HW)], axis=0)    # (4, B)
    coef = jnp.repeat(per_sample, HW, axis=1).astype(jnp.float32)             # (4, N)

    # conv bias + per-sample time bias combined into one (C, N) map.
    bias_map = jnp.repeat((bias[None, :] + temb).T, HW, axis=1).astype(jnp.float32)

    # (B, C, H, W) -> (C, B*HW): channels on sublanes, batch*spatial lane-dense.
    img_cn = jnp.transpose(img, (1, 0, 2, 3)).reshape(C, N).astype(jnp.float32)
    noise_cn = jnp.transpose(noise, (1, 0, 2, 3)).reshape(C, N)

    flops = 2 * C * C * N + 8 * C * N            # channel mix + fused q_sample / MSE
    bytes_accessed = 4 * (3 * C * N + 4 * N + C * C + 128)
    cost = pl.CostEstimate(flops=flops, transcendentals=0, bytes_accessed=bytes_accessed)

    vmem = pltpu.MemorySpace.VMEM
    out = pl.pallas_call(
        _diffusion_loss_kernel,
        in_specs=[pl.BlockSpec(memory_space=vmem)] * 5,      # whole arrays resident
        out_specs=pl.BlockSpec(memory_space=vmem),
        out_shape=jax.ShapeDtypeStruct((1, 128), jnp.float32),
        cost_estimate=cost,
    )(img_cn, noise_cn, coef, w, bias_map)

    return out[0, 0], (t, noise, temb)


def reference_loss(img, t, noise, temb, params, schedule):
    """Pure-JAX reference of the same forward pass (for verification)."""
    w, bias, _, _ = params
    sqrt_ac, sqrt_om, loss_weight = schedule
    B, C, H, W = img.shape
    x0 = img * 2.0 - 1.0
    a = sqrt_ac[t][:, None, None, None]
    s = sqrt_om[t][:, None, None, None]
    x_t = a * x0 + s * noise
    h = jnp.einsum('oc,bchw->bohw', w, x_t, precision=jax.lax.Precision.HIGHEST)
    h = h + bias[None, :, None, None] + temb.reshape(B, C, 1, 1)
    diff = h - noise
    per = jnp.mean(diff * diff, axis=(1, 2, 3)) * loss_weight[t]
    return jnp.mean(per)


# ----------------------------------- main ----------------------------------------------
if __name__ == "__main__":
    B, C, H = 2, 4, 16           # batch, channels, image_size
    HIDDEN = 32                  # time-embedding width
    T = 1000                     # num_timesteps

    root = jax.random.PRNGKey(0)
    k_img, k_w, k_b, k_tw, k_tb, k_fwd = jax.random.split(root, 6)

    # Deterministic synthetic-model parameters (model.channels == model.out_dim == C).
    w = 0.1 * jax.random.normal(k_w, (C, C), dtype=jnp.float32)        # 1x1 conv weight
    bias = 0.1 * jax.random.normal(k_b, (C,), dtype=jnp.float32)       # 1x1 conv bias
    temb_w = 0.1 * jax.random.normal(k_tw, (HIDDEN, C), dtype=jnp.float32)
    temb_b = 0.1 * jax.random.normal(k_tb, (C,), dtype=jnp.float32)
    params = (w, bias, temb_w, temb_b)

    schedule = make_schedule(timesteps=T)

    # Raw image input in [0, 1] (forward() normalizes it internally).
    img = jax.random.uniform(k_img, (B, C, H, H), dtype=jnp.float32)

    loss, (t, noise, temb) = diffusion_forward(
        img, k_fwd, params, schedule, image_size=H, num_timesteps=T)
    loss = jax.block_until_ready(loss)

    ref = jax.block_until_ready(reference_loss(img, t, noise, temb, params, schedule))
    assert jnp.isfinite(loss), "kernel produced non-finite loss"
    assert abs(float(loss) - float(ref)) < 1e-3, (float(loss), float(ref))

    print("KERNEL_OK")
</pallas_src>

<mosaic_0001>
module attributes {stable_mosaic.version = 11 : i64} {
  func.func @_diffusion_loss_kernel(%arg0: memref<4x512xf32, #tpu.memory_space<vmem>>, %arg1: memref<4x512xf32, #tpu.memory_space<vmem>>, %arg2: memref<4x512xf32, #tpu.memory_space<vmem>>, %arg3: memref<4x4xf32, #tpu.memory_space<vmem>>, %arg4: memref<4x512xf32, #tpu.memory_space<vmem>>, %arg5: memref<1x128xf32, #tpu.memory_space<vmem>>) attributes {dimension_semantics = [], scalar_prefetch = 0 : i64, scratch_operands = 0 : i64, tpu.core_type = #tpu.core_type<tc>} {
    %c0 = arith.constant 0 : index
    %c0_0 = arith.constant 0 : index
    %0 = vector.load %arg0[%c0, %c0_0] : memref<4x512xf32, #tpu.memory_space<vmem>>, vector<4x512xf32>
    %c0_1 = arith.constant 0 : index
    %c0_2 = arith.constant 0 : index
    %1 = vector.load %arg1[%c0_1, %c0_2] : memref<4x512xf32, #tpu.memory_space<vmem>>, vector<4x512xf32>
    %c0_3 = arith.constant 0 : index
    %c0_4 = arith.constant 0 : index
    %2 = vector.load %arg2[%c0_3, %c0_4] : memref<4x512xf32, #tpu.memory_space<vmem>>, vector<4x512xf32>
    %3 = vector.extract_strided_slice %2 {offsets = [0, 0], sizes = [1, 512], strides = [1, 1]} : vector<4x512xf32> to vector<1x512xf32>
    %4 = vector.extract_strided_slice %2 {offsets = [1, 0], sizes = [1, 512], strides = [1, 1]} : vector<4x512xf32> to vector<1x512xf32>
    %5 = vector.extract_strided_slice %2 {offsets = [2, 0], sizes = [1, 512], strides = [1, 1]} : vector<4x512xf32> to vector<1x512xf32>
    %6 = vector.extract_strided_slice %2 {offsets = [3, 0], sizes = [1, 512], strides = [1, 1]} : vector<4x512xf32> to vector<1x512xf32>
    %7 = vector.broadcast %3 : vector<1x512xf32> to vector<4x512xf32>
    %8 = arith.mulf %7, %0 : vector<4x512xf32>
    %9 = vector.broadcast %4 : vector<1x512xf32> to vector<4x512xf32>
    %10 = arith.mulf %9, %1 : vector<4x512xf32>
    %11 = arith.addf %8, %10 : vector<4x512xf32>
    %12 = vector.broadcast %5 : vector<1x512xf32> to vector<4x512xf32>
    %13 = arith.addf %11, %12 : vector<4x512xf32>
    %c0_5 = arith.constant 0 : index
    %c0_6 = arith.constant 0 : index
    %14 = vector.load %arg3[%c0_5, %c0_6] : memref<4x4xf32, #tpu.memory_space<vmem>>, vector<4x4xf32>
    %c0_7 = arith.constant 0 : index
    %c0_8 = arith.constant 0 : index
    %15 = vector.load %arg4[%c0_7, %c0_8] : memref<4x512xf32, #tpu.memory_space<vmem>>, vector<4x512xf32>
    %16 = vector.extract_strided_slice %14 {offsets = [0, 0], sizes = [4, 1], strides = [1, 1]} : vector<4x4xf32> to vector<4x1xf32>
    %17 = vector.extract_strided_slice %13 {offsets = [0, 0], sizes = [1, 512], strides = [1, 1]} : vector<4x512xf32> to vector<1x512xf32>
    %18 = vector.broadcast %16 : vector<4x1xf32> to vector<4x512xf32>
    %19 = vector.broadcast %17 : vector<1x512xf32> to vector<4x512xf32>
    %20 = arith.mulf %18, %19 : vector<4x512xf32>
    %21 = arith.addf %15, %20 : vector<4x512xf32>
    %22 = vector.extract_strided_slice %14 {offsets = [0, 1], sizes = [4, 1], strides = [1, 1]} : vector<4x4xf32> to vector<4x1xf32>
    %23 = vector.extract_strided_slice %13 {offsets = [1, 0], sizes = [1, 512], strides = [1, 1]} : vector<4x512xf32> to vector<1x512xf32>
    %24 = vector.broadcast %22 : vector<4x1xf32> to vector<4x512xf32>
    %25 = vector.broadcast %23 : vector<1x512xf32> to vector<4x512xf32>
    %26 = arith.mulf %24, %25 : vector<4x512xf32>
    %27 = arith.addf %21, %26 : vector<4x512xf32>
    %28 = vector.extract_strided_slice %14 {offsets = [0, 2], sizes = [4, 1], strides = [1, 1]} : vector<4x4xf32> to vector<4x1xf32>
    %29 = vector.extract_strided_slice %13 {offsets = [2, 0], sizes = [1, 512], strides = [1, 1]} : vector<4x512xf32> to vector<1x512xf32>
    %30 = vector.broadcast %28 : vector<4x1xf32> to vector<4x512xf32>
    %31 = vector.broadcast %29 : vector<1x512xf32> to vector<4x512xf32>
    %32 = arith.mulf %30, %31 : vector<4x512xf32>
    %33 = arith.addf %27, %32 : vector<4x512xf32>
    %34 = vector.extract_strided_slice %14 {offsets = [0, 3], sizes = [4, 1], strides = [1, 1]} : vector<4x4xf32> to vector<4x1xf32>
    %35 = vector.extract_strided_slice %13 {offsets = [3, 0], sizes = [1, 512], strides = [1, 1]} : vector<4x512xf32> to vector<1x512xf32>
    %36 = vector.broadcast %34 : vector<4x1xf32> to vector<4x512xf32>
    %37 = vector.broadcast %35 : vector<1x512xf32> to vector<4x512xf32>
    %38 = arith.mulf %36, %37 : vector<4x512xf32>
    %39 = arith.addf %33, %38 : vector<4x512xf32>
    %40 = arith.subf %39, %1 : vector<4x512xf32>
    %41 = arith.mulf %40, %40 : vector<4x512xf32>
    %42 = vector.broadcast %6 : vector<1x512xf32> to vector<4x512xf32>
    %43 = arith.mulf %41, %42 : vector<4x512xf32>
    %44 = vector.shape_cast %43 : vector<4x512xf32> to vector<1x4x512xf32>
    %cst = arith.constant dense<0.000000e+00> : vector<1xf32>
    %45 = vector.multi_reduction <add>, %44, %cst [1, 2] : vector<1x4x512xf32> to vector<1xf32>
    %46 = vector.shape_cast %45 : vector<1xf32> to vector<1x1x1xf32>
    %47 = vector.extract %46[0, 0, 0] : f32 from vector<1x1x1xf32>
    %48 = vector.broadcast %47 : f32 to vector<1x128xf32>
    %c0_9 = arith.constant 0 : index
    %c0_10 = arith.constant 0 : index
    %49 = vector.load %arg5[%c0_9, %c0_10] : memref<1x128xf32, #tpu.memory_space<vmem>>, vector<1x128xf32>
    tpu.vector_store %arg5[%c0_9, %c0_10], %48 {strides = array<i32>} : memref<1x128xf32, #tpu.memory_space<vmem>>, vector<1x128xf32>,
    return
  }
}

</mosaic_0001>

<llo_original>
// kernel: tpu_custom_call.1
$region0: #{tpu_custom_call.1}
  #allocation0 [shape = 'u32[]', space=smem, size = 0x4, offset = 0x4, fixed_abs, tag = 'smem constant byte address 0x4 - core index']
  #allocation1 [shape = 'u32[72,128]{1,0:T(1,128)}', space=vmem, size = 0x9000, scoped, tag = 'internal scratch']
  %s0 = inlined_call_operand.hbm [shape: f32[4,512], index: 0, kind: input, shape index: {}]
  %s1 = inlined_call_operand.hbm [shape: f32[4,512], index: 1, kind: input, shape index: {}]
  %s2 = inlined_call_operand.hbm [shape: f32[4,512], index: 2, kind: input, shape index: {}]
  %s3 = inlined_call_operand.hbm [shape: f32[4,4], index: 3, kind: input, shape index: {}]
  %s4 = inlined_call_operand.hbm [shape: f32[4,512], index: 4, kind: input, shape index: {}]
  %s5 = inlined_call_operand.hbm [shape: f32[1,128], index: 5, kind: output, shape index: {}]
  %s6 = sld [smem:[#allocation0]]
  $region50: #{tpu_custom_call.1} parent=0
    _
  %s8 = ssub.s32 1, %s6
  %s9 = scalar_select 0, %s8, %s6
  $region1: #{tpu_custom_call.1} parent=0
    #allocation2 [shape = 'u8[8192]{0}', space=vmem, size = 0x2000, scoped, tag = 'input window, operand 0, single buffered']
    #allocation3 [shape = 's32[1]{0}', space=sflag, size = 0x4, scoped, tag = 'scoped memory for tpu_custom_call.1']
    #allocation4 [shape = 's32[1]{0}', space=sflag, size = 0x4, scoped, tag = 'scoped memory for tpu_custom_call.1']
    #allocation5 [shape = 'u8[8192]{0}', space=vmem, size = 0x2000, scoped, tag = 'input window, operand 1, single buffered']
    #allocation6 [shape = 's32[1]{0}', space=sflag, size = 0x4, scoped, tag = 'scoped memory for tpu_custom_call.1']
    #allocation7 [shape = 'u8[8192]{0}', space=vmem, size = 0x2000, scoped, tag = 'input window, operand 2, single buffered']
    #allocation8 [shape = 'u8[2048]{0}', space=vmem, size = 0x800, scoped, tag = 'input window, operand 3, single buffered']
    #allocation9 [shape = 's32[1]{0}', space=sflag, size = 0x4, scoped, tag = 'scoped memory for tpu_custom_call.1']
    #allocation10 [shape = 'u8[8192]{0}', space=vmem, size = 0x2000, scoped, tag = 'input window, operand 4, single buffered']
    #allocation11 [shape = 'u8[512]{0}', space=vmem, size = 0x400, scoped, tag = 'output window, operand 0, single buffered']
    %10 = vsyncpa [#allocation3], 0
    %11 = vsyncpa [#allocation6], 0
    %12 = vsyncpa [#allocation9], 0
    %13 = vsyncpa [#allocation4], 0
    // Predicated region
    $region2: #{tpu_custom_call.1} parent=1 // pred_check
      _
    $region3: #{tpu_custom_call.1} parent=1 // pred_check_branch
      %15 = sbr.rel (0) target = $region5
    $region4: #{tpu_custom_call.1} parent=1 // pred_region
      %17 = vsyncadd [#allocation3], 0
      %s19 = sshll.u32 %s0, 4
      %s20 = int_to_ptr.hbm [resolvable:$true] %s19
      %s21 = sshll.u32 [#allocation2], 4
      %s22 = int_to_ptr.vmem [resolvable:$true] %s21
      %24 = dma.hbm_to_vmem [thread:$0]  %s20, 256, %s22, [#allocation3]
    $region5: #{tpu_custom_call.1} parent=1 // pred_fallthru
      _
    // Predicated region
    $region6: #{tpu_custom_call.1} parent=1 // pred_check
      _
    $region7: #{tpu_custom_call.1} parent=1 // pred_check_branch
      %26 = sbr.rel (0) target = $region9
    $region8: #{tpu_custom_call.1} parent=1 // pred_region
      %28 = vsyncadd [#allocation6], 0
      %s30 = sshll.u32 %s1, 4
      %s31 = int_to_ptr.hbm [resolvable:$true] %s30
      %s32 = sshll.u32 [#allocation5], 4
      %s33 = int_to_ptr.vmem [resolvable:$true] %s32
      %35 = dma.hbm_to_vmem [thread:$0]  %s31, 256, %s33, [#allocation6]
    $region9: #{tpu_custom_call.1} parent=1 // pred_fallthru
      _
    // Predicated region
    $region10: #{tpu_custom_call.1} parent=1 // pred_check
      _
    $region11: #{tpu_custom_call.1} parent=1 // pred_check_branch
      %37 = sbr.rel (0) target = $region13
    $region12: #{tpu_custom_call.1} parent=1 // pred_region
      %39 = vsyncadd [#allocation6], 0
      %s41 = sshll.u32 %s2, 4
      %s42 = int_to_ptr.hbm [resolvable:$true] %s41
      %s43 = sshll.u32 [#allocation7], 4
      %s44 = int_to_ptr.vmem [resolvable:$true] %s43
      %46 = dma.hbm_to_vmem [thread:$0]  %s42, 256, %s44, [#allocation6]
    $region13: #{tpu_custom_call.1} parent=1 // pred_fallthru
      _
    // Predicated region
    $region14: #{tpu_custom_call.1} parent=1 // pred_check
      _
    $region15: #{tpu_custom_call.1} parent=1 // pred_check_branch
      %48 = sbr.rel (0) target = $region17
    $region16: #{tpu_custom_call.1} parent=1 // pred_region
      %50 = vsyncadd [#allocation9], 0
      %s52 = sshll.u32 %s3, 4
      %s53 = int_to_ptr.hbm [resolvable:$true] %s52
      %s54 = sshll.u32 [#allocation8], 4
      %s55 = int_to_ptr.vmem [resolvable:$true] %s54
      %57 = dma.hbm_to_vmem [thread:$0]  %s53, 64, %s55, [#allocation9]
    $region17: #{tpu_custom_call.1} parent=1 // pred_fallthru
      _
    // Predicated region
    $region18: #{tpu_custom_call.1} parent=1 // pred_check
      _
    $region19: #{tpu_custom_call.1} parent=1 // pred_check_branch
      %59 = sbr.rel (0) target = $region21
    $region20: #{tpu_custom_call.1} parent=1 // pred_region
      %61 = vsyncadd [#allocation9], 0
      %s63 = sshll.u32 %s4, 4
      %s64 = int_to_ptr.hbm [resolvable:$true] %s63
      %s65 = sshll.u32 [#allocation10], 4
      %s66 = int_to_ptr.vmem [resolvable:$true] %s65
      %68 = dma.hbm_to_vmem [thread:$0]  %s64, 256, %s66, [#allocation9]
    $region21: #{tpu_custom_call.1} parent=1 // pred_fallthru
      _
    // Predicated region
    $region22: #{tpu_custom_call.1} parent=1 // pred_check
      _
    $region23: #{tpu_custom_call.1} parent=1 // pred_check_branch
      %70 = sbr.rel (0) target = $region25
    $region24: #{tpu_custom_call.1} parent=1 // pred_region
      %72 = dma.done [#allocation3], 256
    $region25: #{tpu_custom_call.1} parent=1 // pred_fallthru
      _
    // Predicated region
    $region26: #{tpu_custom_call.1} parent=1 // pred_check
      _
    $region27: #{tpu_custom_call.1} parent=1 // pred_check_branch
      %74 = sbr.rel (0) target = $region29
    $region28: #{tpu_custom_call.1} parent=1 // pred_region
      %76 = dma.done [#allocation6], 256
    $region29: #{tpu_custom_call.1} parent=1 // pred_fallthru
      _
    // Predicated region
    $region30: #{tpu_custom_call.1} parent=1 // pred_check
      _
    $region31: #{tpu_custom_call.1} parent=1 // pred_check_branch
      %78 = sbr.rel (0) target = $region33
    $region32: #{tpu_custom_call.1} parent=1 // pred_region
      %80 = dma.done [#allocation6], 256
    $region33: #{tpu_custom_call.1} parent=1 // pred_fallthru
      _
    // Predicated region
    $region34: #{tpu_custom_call.1} parent=1 // pred_check
      _
    $region35: #{tpu_custom_call.1} parent=1 // pred_check_branch
      %82 = sbr.rel (0) target = $region37
    $region36: #{tpu_custom_call.1} parent=1 // pred_region
      %84 = dma.done [#allocation9], 64
    $region37: #{tpu_custom_call.1} parent=1 // pred_fallthru
      _
    // Predicated region
    $region38: #{tpu_custom_call.1} parent=1 // pred_check
      _
    $region39: #{tpu_custom_call.1} parent=1 // pred_check_branch
      %86 = sbr.rel (0) target = $region41
    $region40: #{tpu_custom_call.1} parent=1 // pred_region
      %88 = dma.done [#allocation9], 256
    $region41: #{tpu_custom_call.1} parent=1 // pred_fallthru
      _
    %v89 = vld [vmem:[#allocation2] sm:$0xff]
    %v90 = vld [vmem:[#allocation2 + $0x8] sm:$0xff]
    %v91 = vld [vmem:[#allocation5] sm:$0xff]
    %v92 = vld [vmem:[#allocation5 + $0x8] sm:$0xff]
    %v93 = vld [vmem:[#allocation7] sm:$0xff]
    %v94 = vld [vmem:[#allocation7 + $0x8] sm:$0xff]
    %v97 = vperm.slane %v93, 0
    %v98 = vperm.slane %v93, 4
    %v99 = vperm.slane %v94, 0
    %v100 = vperm.slane %v94, 4
    %v105 = vperm.slane %v97, 0
    %v106 = vperm.slane %v98, 0
    %v107 = vperm.slane %v99, 0
    %v108 = vperm.slane %v100, 0
    %111 = vst [vmem:[#allocation1] ss:$2 sm:$0xff] %v89
    %s112 = scalar_lea.vmem [#allocation1], 16
    %113 = vst [vmem:[%s112] ss:$2 sm:$0xff] %v90
    %v114 = vld.sshfl [vmem:[#allocation1] sm:$0xff pattern:$0x75316420]
    %v115 = vld.sshfl [vmem:[#allocation1 + $0x8] sm:$0xff pattern:$0x75316420]
    %v116 = vld.sshfl [vmem:[#allocation1 + $0x10] sm:$0xff pattern:$0x75316420]
    %v117 = vld.sshfl [vmem:[#allocation1 + $0x18] sm:$0xff pattern:$0x75316420]
    %v122 = vmul.f32 %v105, %v114
    %v123 = vmul.f32 %v106, %v115
    %v124 = vmul.f32 %v107, %v116
    %v125 = vmul.f32 %v108, %v117
    %v126 = vperm.slane %v93, 1
    %v127 = vperm.slane %v93, 5
    %v128 = vperm.slane %v94, 1
    %v129 = vperm.slane %v94, 5
    %v134 = vperm.slane %v126, 1
    %v135 = vperm.slane %v127, 1
    %v136 = vperm.slane %v128, 1
    %v137 = vperm.slane %v129, 1
    %140 = vst [vmem:[#allocation1] ss:$2 sm:$0xff] %v91
    %s141 = scalar_lea.vmem [#allocation1], 16
    %142 = vst [vmem:[%s141] ss:$2 sm:$0xff] %v92
    %v143 = vld.sshfl [vmem:[#allocation1] sm:$0xff pattern:$0x75316420]
    %v144 = vld.sshfl [vmem:[#allocation1 + $0x8] sm:$0xff pattern:$0x75316420]
    %v145 = vld.sshfl [vmem:[#allocation1 + $0x10] sm:$0xff pattern:$0x75316420]
    %v146 = vld.sshfl [vmem:[#allocation1 + $0x18] sm:$0xff pattern:$0x75316420]
    %v151 = vmul.f32 %v134, %v143
    %v152 = vmul.f32 %v135, %v144
    %v153 = vmul.f32 %v136, %v145
    %v154 = vmul.f32 %v137, %v146
    %v155 = vadd.f32 %v122, %v151
    %v156 = vadd.f32 %v123, %v152
    %v157 = vadd.f32 %v124, %v153
    %v158 = vadd.f32 %v125, %v154
    %v159 = vperm.slane %v93, 2
    %v160 = vperm.slane %v93, 6
    %v161 = vperm.slane %v94, 2
    %v162 = vperm.slane %v94, 6
    %v167 = vperm.slane %v159, 2
    %v168 = vperm.slane %v160, 2
    %v169 = vperm.slane %v161, 2
    %v170 = vperm.slane %v162, 2
    %v171 = vadd.f32 %v155, %v167
    %v172 = vadd.f32 %v156, %v168
    %v173 = vadd.f32 %v157, %v169
    %v174 = vadd.f32 %v158, %v170
    %v175 = vld [vmem:[#allocation8] sm:$0xf]
    %v176 = vld [vmem:[#allocation10] sm:$0xff]
    %v177 = vld [vmem:[#allocation10 + $0x8] sm:$0xff]
    %179 = vset.pattern.permute.xlu0 0
    %180 = vperm.xlu0 %179, %v175
    %v181 = vpop.permute.xlu0 %180
    %v183 = vperm.slane %v171, 0
    %v184 = vperm.slane %v172, 0
    %v185 = vperm.slane %v173, 0
    %v186 = vperm.slane %v174, 0
    %v187 = vmul.f32 %v181, %v183
    %v188 = vmul.f32 %v181, %v184
    %v189 = vmul.f32 %v181, %v185
    %v190 = vmul.f32 %v181, %v186
    %v195 = vrot.slane %v188, 4
    %v196 = vrot.slane %v190, 4
    %vm197 = vcmask 1043456
    %v198 = vsel %vm197, %v187, %v195
    %v199 = vsel %vm197, %v189, %v196
    %v202 = vadd.f32 %v176, %v198
    %v203 = vadd.f32 %v177, %v199
    %204 = vset.pattern.permute.xlu0 1
    %205 = vperm.xlu0 %204, %v175
    %v206 = vpop.permute.xlu0 %205
    %v208 = vperm.slane %v171, 1
    %v209 = vperm.slane %v172, 1
    %v210 = vperm.slane %v173, 1
    %v211 = vperm.slane %v174, 1
    %v212 = vmul.f32 %v206, %v208
    %v213 = vmul.f32 %v206, %v209
    %v214 = vmul.f32 %v206, %v210
    %v215 = vmul.f32 %v206, %v211
    %v220 = vrot.slane %v213, 4
    %v221 = vrot.slane %v215, 4
    %v222 = vsel %vm197, %v212, %v220
    %v223 = vsel %vm197, %v214, %v221
    %v226 = vadd.f32 %v202, %v222
    %v227 = vadd.f32 %v203, %v223
    %228 = vset.pattern.permute.xlu0 2
    %229 = vperm.xlu0 %228, %v175
    %v230 = vpop.permute.xlu0 %229
    %v232 = vperm.slane %v171, 2
    %v233 = vperm.slane %v172, 2
    %v234 = vperm.slane %v173, 2
    %v235 = vperm.slane %v174, 2
    %v236 = vmul.f32 %v230, %v232
    %v237 = vmul.f32 %v230, %v233
    %v238 = vmul.f32 %v230, %v234
    %v239 = vmul.f32 %v230, %v235
    %v244 = vrot.slane %v237, 4
    %v245 = vrot.slane %v239, 4
    %v246 = vsel %vm197, %v236, %v244
    %v247 = vsel %vm197, %v238, %v245
    %v250 = vadd.f32 %v226, %v246
    %v251 = vadd.f32 %v227, %v247
    %252 = vset.pattern.permute.xlu0 3
    %253 = vperm.xlu0 %252, %v175
    %v254 = vpop.permute.xlu0 %253
    %v256 = vperm.slane %v171, 3
    %v257 = vperm.slane %v172, 3
    %v258 = vperm.slane %v173, 3
    %v259 = vperm.slane %v174, 3
    %v260 = vmul.f32 %v254, %v256
    %v261 = vmul.f32 %v254, %v257
    %v262 = vmul.f32 %v254, %v258
    %v263 = vmul.f32 %v254, %v259
    %v268 = vrot.slane %v261, 4
    %v269 = vrot.slane %v263, 4
    %v270 = vsel %vm197, %v260, %v268
    %v271 = vsel %vm197, %v262, %v269
    %v274 = vadd.f32 %v250, %v270
    %v275 = vadd.f32 %v251, %v271
    %v276 = vsub.f32 %v274, %v91
    %v277 = vsub.f32 %v275, %v92
    %v278 = vmul.f32 %v276, %v276
    %v279 = vmul.f32 %v277, %v277
    %v280 = vperm.slane %v93, 3
    %v281 = vperm.slane %v93, 7
    %v282 = vperm.slane %v94, 3
    %v283 = vperm.slane %v94, 7
    %v288 = vperm.slane %v280, 3
    %v289 = vperm.slane %v281, 3
    %v290 = vperm.slane %v282, 3
    %v291 = vperm.slane %v283, 3
    %v296 = vrot.slane %v289, 4
    %v297 = vrot.slane %v291, 4
    %v298 = vsel %vm197, %v288, %v296
    %v299 = vsel %vm197, %v290, %v297
    %v302 = vmul.f32 %v278, %v298
    %v303 = vmul.f32 %v279, %v299
    %306 = vst [vmem:[#allocation1] ss:$2 sm:$0xff] %v302
    %s307 = scalar_lea.vmem [#allocation1], 16
    %308 = vst [vmem:[%s307] ss:$2 sm:$0xff] %v303
    %v309 = vld.sshfl [vmem:[#allocation1] sm:$0xff pattern:$0x75316420]
    %v310 = vld.sshfl [vmem:[#allocation1 + $0x8] sm:$0xff pattern:$0x75316420]
    %v311 = vld.sshfl [vmem:[#allocation1 + $0x10] sm:$0xff pattern:$0x75316420]
    %v312 = vld.sshfl [vmem:[#allocation1 + $0x18] sm:$0xff pattern:$0x75316420]
    %v317 = vsel %vm197, %v309, 0.0
    %v318 = vsel %vm197, %v310, 0.0
    %v319 = vadd.f32 %v317, %v318
    %v320 = vsel %vm197, %v311, 0.0
    %v321 = vadd.f32 %v319, %v320
    %v322 = vsel %vm197, %v312, 0.0
    %v323 = vadd.f32 %v321, %v322
    %324 = vadd.xlane.f32.xlu0 %v323
    %v325 = vpop.xlane.xlu0 %324
    %v326 = vrot.slane %v325, 4
    %v327 = vadd.f32 %v325, %v326
    %v328 = vrot.slane %v327, 2
    %v329 = vadd.f32 %v327, %v328
    %v330 = vrot.slane %v329, 1
    %v331 = vadd.f32 %v329, %v330
    %s332 = vtos %v331
    %v333 = vstv %s332
    %334 = vst [vmem:[#allocation11] sm:$0x1] %v333
    // Predicated region
    $region42: #{tpu_custom_call.1} parent=1 // pred_check
      _
    $region43: #{tpu_custom_call.1} parent=1 // pred_check_branch
      %336 = sbr.rel (0) target = $region45
    $region44: #{tpu_custom_call.1} parent=1 // pred_region
      %338 = vsyncadd [#allocation4], 0
      %s340 = sshll.u32 [#allocation11], 4
      %s341 = int_to_ptr.vmem [resolvable:$true] %s340
      %s342 = sshll.u32 %s5, 4
      %s343 = int_to_ptr.hbm [resolvable:$true] %s342
      %345 = dma.vmem_to_hbm [thread:$0]  %s341, 16, %s343, [#allocation4]
    $region45: #{tpu_custom_call.1} parent=1 // pred_fallthru
      _
    // Predicated region
    $region46: #{tpu_custom_call.1} parent=1 // pred_check
      _
    $region47: #{tpu_custom_call.1} parent=1 // pred_check_branch
      %347 = sbr.rel (0) target = $region49
    $region48: #{tpu_custom_call.1} parent=1 // pred_region
      %349 = dma.done [#allocation4], 16
    $region49: #{tpu_custom_call.1} parent=1 // pred_fallthru
      _
    %350 = vsyncpa [#allocation3], 1
    %351 = vsyncpa [#allocation6], 1
    %352 = vsyncpa [#allocation9], 1
    %353 = vsyncpa [#allocation4], 1

</llo_original>
